<compile_context>
chip_gen: v7x
topology: tpu7x:2x2x1
jax: 0.10.0
libtpu: 0.0.40
codegen_flags: <defaults>
</compile_context>

<pallas_src>
import jax
import jax.numpy as jnp
from jax.experimental import pallas as pl
from jax.experimental.pallas import tpu as pltpu


def attention_kernel(h_ref, p_att_ref, feats_ref, mask_ref,
                     wh_ref, bh_ref, wa_ref, ba_ref, out_ref):
    # h2att linear on the MXU: (TB, R) @ (R, H) + (1, H)
    att_h = jnp.dot(h_ref[...], wh_ref[...],
                    preferred_element_type=jnp.float32) + bh_ref[...]

    # dot = tanh(p_att_feats + att_h[:, None, :])   -> (TB, K, H)  (EUP tanh, f32)
    dot = jnp.tanh(p_att_ref[...].astype(jnp.float32) + att_h[:, None, :])

    # alpha_net projection: contract H -> (TB, K)  (VPU mul + XLU lane reduce)
    score = jnp.sum(dot * wa_ref[...][None, :, :], axis=-1) + ba_ref[0, 0]

    # masked softmax over att_size, fused:
    #   softmax-then-mask-renorm == exp(s-m)*mask / sum(exp(s-m)*mask)
    m = jnp.max(score, axis=1, keepdims=True)
    e = jnp.exp(score - m) * mask_ref[...]
    weight = e * pl.reciprocal(jnp.sum(e, axis=1, keepdims=True), approx=True)

    # att_res = bmm(weight[:,None,:], att_feats).squeeze(1) on the MXU:
    # (TB,1,K) @ (TB,K,R) -> (TB,1,R); f32 accumulation.
    att3 = jnp.einsum('bqk,bkr->bqr',
                      weight[:, None, :].astype(feats_ref.dtype),
                      feats_ref[...],
                      preferred_element_type=jnp.float32)
    out_ref[...] = att3[:, 0, :].astype(out_ref.dtype)


def _choose_tile_b(batch, att_size, rnn_size, att_hid,
                   feats_itemsize, p_att_itemsize,
                   vmem_budget_bytes=16 * 1024 * 1024):
    """Largest batch tile whose double-buffered streamed blocks fit the budget."""
    per_row = 2 * att_size * (rnn_size * feats_itemsize + att_hid * p_att_itemsize)
    tb = vmem_budget_bytes // max(1, per_row)
    if tb >= batch:
        return int(batch)
    if tb >= 8:
        return int((tb // 8) * 8)      # keep the sublane dim 8-aligned
    return int(min(8, batch))          # smallest clean tile (may exceed budget slightly)


def attention_forward(h, att_feats, p_att_feats, params, att_masks=None):
    h = h.astype(jnp.float32)
    B, rnn_size = h.shape
    att_hid = params["w_h2att"].shape[1]
    # att_size = numel // B // rnn_size  (mirrors the PyTorch forward)
    att_size = att_feats.size // B // rnn_size

    # Keep the two big tensors in their input dtype (bf16 supported) -> less HBM traffic.
    att_feats = att_feats.reshape(B, att_size, rnn_size)
    p_att_feats = p_att_feats.reshape(B, att_size, att_hid)
    if att_masks is None:
        att_masks = jnp.ones((B, att_size), jnp.float32)
    else:
        att_masks = att_masks.reshape(B, att_size).astype(jnp.float32)

    wh = params["w_h2att"].astype(jnp.float32).reshape(rnn_size, att_hid)
    bh = params["b_h2att"].astype(jnp.float32).reshape(1, att_hid)
    wa = params["w_alpha"].astype(jnp.float32).reshape(1, att_hid)
    ba = params["b_alpha"].astype(jnp.float32).reshape(1, 1)

    tb = _choose_tile_b(B, att_size, rnn_size, att_hid,
                        att_feats.dtype.itemsize, p_att_feats.dtype.itemsize)
    grid = (pl.cdiv(B, tb),)

    return pl.pallas_call(
        attention_kernel,
        out_shape=jax.ShapeDtypeStruct((B, rnn_size), jnp.float32),
        grid=grid,
        in_specs=[
            pl.BlockSpec((tb, rnn_size), lambda i: (i, 0)),            # h
            pl.BlockSpec((tb, att_size, att_hid), lambda i: (i, 0, 0)),  # p_att_feats
            pl.BlockSpec((tb, att_size, rnn_size), lambda i: (i, 0, 0)), # att_feats
            pl.BlockSpec((tb, att_size), lambda i: (i, 0)),            # mask
            pl.BlockSpec((rnn_size, att_hid), lambda i: (0, 0)),       # w_h2att (resident)
            pl.BlockSpec((1, att_hid), lambda i: (0, 0)),              # b_h2att
            pl.BlockSpec((1, att_hid), lambda i: (0, 0)),              # w_alpha
            pl.BlockSpec((1, 1), lambda i: (0, 0)),                    # b_alpha
        ],
        out_specs=pl.BlockSpec((tb, rnn_size), lambda i: (i, 0)),
        compiler_params=pltpu.CompilerParams(
            dimension_semantics=("parallel",),
            vmem_limit_bytes=48 * 1024 * 1024),
    )(h, p_att_feats, att_feats, att_masks, wh, bh, wa, ba)


def _reference(h, att_feats, p_att_feats, params, att_masks=None):
    # pure-JAX reference mirroring the PyTorch forward
    B, R = h.shape
    H = params["w_h2att"].shape[1]
    K = att_feats.shape[1]
    att_h = h @ params["w_h2att"] + params["b_h2att"]
    dot = jnp.tanh(p_att_feats.astype(jnp.float32) + att_h[:, None, :])
    score = dot.reshape(-1, H) @ params["w_alpha"].reshape(H, 1) + params["b_alpha"]
    score = score.reshape(B, K)
    w = jax.nn.softmax(score, axis=1)
    if att_masks is not None:
        w = w * att_masks
        w = w / jnp.sum(w, axis=1, keepdims=True)
    return jnp.einsum("bk,bkr->br", w, att_feats.astype(jnp.float32))


if __name__ == "__main__":
    B, att_size, rnn_size, att_hid = 2, 8, 32, 32

    key = jax.random.PRNGKey(0)
    k1, k2, k3, k4, k5, k6 = jax.random.split(key, 6)

    params = {
        "w_h2att": (jax.random.normal(k1, (rnn_size, att_hid), jnp.float32)
                    * (1.0 / jnp.sqrt(rnn_size))),
        "b_h2att": jax.random.normal(k2, (att_hid,), jnp.float32) * 0.01,
        "w_alpha": (jax.random.normal(k3, (att_hid,), jnp.float32)
                    * (1.0 / jnp.sqrt(att_hid))),
        "b_alpha": jax.random.normal(k4, (1,), jnp.float32) * 0.01,
    }

    h = jax.random.normal(k5, (B, rnn_size), jnp.float32)
    feats_key, pfeats_key = jax.random.split(k6)
    att_feats = jax.random.normal(feats_key, (B, att_size, rnn_size), jnp.float32)
    p_att_feats = jax.random.normal(pfeats_key, (B, att_size, att_hid), jnp.float32)
    att_masks = jnp.concatenate(
        [jnp.ones((B, att_size - 2), jnp.float32),
         jnp.array([[1.0, 1.0], [0.0, 0.0]], jnp.float32)], axis=1)

    # 1) f32 streamed path, with mask
    out = attention_forward(h, att_feats, p_att_feats, params, att_masks)
    out = jax.block_until_ready(out)
    ref = _reference(h, att_feats, p_att_feats, params, att_masks)
    assert out.shape == (B, rnn_size)
    assert jnp.allclose(out, ref, atol=3e-3, rtol=3e-3)

    # 2) bf16 streamed path (halves HBM traffic for the two big tensors)
    att_feats_bf16 = att_feats.astype(jnp.bfloat16)
    p_att_feats_bf16 = p_att_feats.astype(jnp.bfloat16)
    out_bf16 = attention_forward(h, att_feats_bf16, p_att_feats_bf16, params, att_masks)
    out_bf16 = jax.block_until_ready(out_bf16)
    ref_bf16 = _reference(h, att_feats_bf16.astype(jnp.float32),
                          p_att_feats_bf16.astype(jnp.float32), params, att_masks)
    assert jnp.allclose(out_bf16, ref_bf16, atol=3e-2, rtol=3e-2)

    # 3) no-mask path (att_masks=None)
    out_nm = attention_forward(h, att_feats, p_att_feats, params, None)
    out_nm = jax.block_until_ready(out_nm)
    ref_nm = _reference(h, att_feats, p_att_feats, params, None)
    assert jnp.allclose(out_nm, ref_nm, atol=3e-3, rtol=3e-3)

    print("KERNEL_OK")
</pallas_src>

<mosaic_0001>
module attributes {stable_mosaic.version = 11 : i64} {
  func.func @attention_kernel(%arg0: i32, %arg1: memref<2x32xf32, #tpu.memory_space<vmem>>, %arg2: memref<2x8x32xf32, #tpu.memory_space<vmem>>, %arg3: memref<2x8x32xf32, #tpu.memory_space<vmem>>, %arg4: memref<2x8xf32, #tpu.memory_space<vmem>>, %arg5: memref<32x32xf32, #tpu.memory_space<vmem>>, %arg6: memref<1x32xf32, #tpu.memory_space<vmem>>, %arg7: memref<1x32xf32, #tpu.memory_space<vmem>>, %arg8: memref<1x1xf32, #tpu.memory_space<vmem>>, %arg9: memref<2x32xf32, #tpu.memory_space<vmem>>) attributes {dimension_semantics = [#tpu.dimension_semantics<parallel>], iteration_bounds = array<i64: 1>, scalar_prefetch = 0 : i64, scratch_operands = 0 : i64, tpu.core_type = #tpu.core_type<tc>, window_params = [{transform_indices = @transform_0, window_bounds = array<i64: 2, 32>}, {transform_indices = @transform_1, window_bounds = array<i64: 2, 8, 32>}, {transform_indices = @transform_2, window_bounds = array<i64: 2, 8, 32>}, {transform_indices = @transform_3, window_bounds = array<i64: 2, 8>}, {pipeline_mode = #tpu.pipeline_mode<synchronous>, transform_indices = @transform_4, window_bounds = array<i64: 32, 32>}, {pipeline_mode = #tpu.pipeline_mode<synchronous>, transform_indices = @transform_5, window_bounds = array<i64: 1, 32>}, {pipeline_mode = #tpu.pipeline_mode<synchronous>, transform_indices = @transform_6, window_bounds = array<i64: 1, 32>}, {pipeline_mode = #tpu.pipeline_mode<synchronous>, transform_indices = @transform_7, window_bounds = array<i64: 1, 1>}, {transform_indices = @transform_8, window_bounds = array<i64: 2, 32>}]} {
    %c0 = arith.constant 0 : index
    %c0_0 = arith.constant 0 : index
    %0 = vector.load %arg1[%c0, %c0_0] : memref<2x32xf32, #tpu.memory_space<vmem>>, vector<2x32xf32>
    %c0_1 = arith.constant 0 : index
    %c0_2 = arith.constant 0 : index
    %1 = vector.load %arg5[%c0_1, %c0_2] : memref<32x32xf32, #tpu.memory_space<vmem>>, vector<32x32xf32>
    %cst = arith.constant dense<0.000000e+00> : vector<2x32xf32>
    %2 = tpu.matmul %0, %1, %cst {dimension_numbers = #tpu.dot_dimension_numbers<[1], [0], [0], [1], [0, 0, 1, 1], [], []>} : vector<2x32xf32>, vector<32x32xf32>, vector<2x32xf32> -> vector<2x32xf32>
    %c0_3 = arith.constant 0 : index
    %c0_4 = arith.constant 0 : index
    %3 = vector.load %arg6[%c0_3, %c0_4] : memref<1x32xf32, #tpu.memory_space<vmem>>, vector<1x32xf32>
    %4 = vector.broadcast %3 : vector<1x32xf32> to vector<2x32xf32>
    %5 = arith.addf %2, %4 : vector<2x32xf32>
    %c0_5 = arith.constant 0 : index
    %c0_6 = arith.constant 0 : index
    %c0_7 = arith.constant 0 : index
    %6 = vector.load %arg2[%c0_5, %c0_6, %c0_7] : memref<2x8x32xf32, #tpu.memory_space<vmem>>, vector<2x8x32xf32>
    %7 = vector.shape_cast %5 : vector<2x32xf32> to vector<2x1x32xf32>
    %8 = vector.broadcast %7 : vector<2x1x32xf32> to vector<2x8x32xf32>
    %9 = arith.addf %6, %8 : vector<2x8x32xf32>
    %10 = math.tanh %9 : vector<2x8x32xf32>
    %c0_8 = arith.constant 0 : index
    %c0_9 = arith.constant 0 : index
    %11 = vector.load %arg7[%c0_8, %c0_9] : memref<1x32xf32, #tpu.memory_space<vmem>>, vector<1x32xf32>
    %12 = vector.shape_cast %11 : vector<1x32xf32> to vector<1x1x32xf32>
    %13 = vector.broadcast %12 : vector<1x1x32xf32> to vector<2x8x32xf32>
    %14 = arith.mulf %10, %13 : vector<2x8x32xf32>
    %cst_10 = arith.constant dense<0.000000e+00> : vector<2x8xf32>
    %15 = vector.multi_reduction <add>, %14, %cst_10 [2] : vector<2x8x32xf32> to vector<2x8xf32>
    %c0_11 = arith.constant 0 : index
    %c0_12 = arith.constant 0 : index
    %16 = vector.load %arg8[%c0_11, %c0_12] : memref<1x1xf32, #tpu.memory_space<vmem>>, vector<1x1xf32>
    %17 = vector.extract %16[0, 0] : f32 from vector<1x1xf32>
    %18 = vector.broadcast %17 : f32 to vector<2x8xf32>
    %19 = arith.addf %15, %18 : vector<2x8xf32>
    %cst_13 = arith.constant dense<0xFF800000> : vector<2xf32>
    %20 = vector.multi_reduction <maximumf>, %19, %cst_13 [1] : vector<2x8xf32> to vector<2xf32>
    %21 = vector.shape_cast %20 : vector<2xf32> to vector<2x1xf32>
    %22 = vector.broadcast %21 : vector<2x1xf32> to vector<2x8xf32>
    %23 = arith.subf %19, %22 : vector<2x8xf32>
    %24 = math.exp %23 : vector<2x8xf32>
    %c0_14 = arith.constant 0 : index
    %c0_15 = arith.constant 0 : index
    %25 = vector.load %arg4[%c0_14, %c0_15] : memref<2x8xf32, #tpu.memory_space<vmem>>, vector<2x8xf32>
    %26 = arith.mulf %24, %25 : vector<2x8xf32>
    %cst_16 = arith.constant dense<0.000000e+00> : vector<2xf32>
    %27 = vector.multi_reduction <add>, %26, %cst_16 [1] : vector<2x8xf32> to vector<2xf32>
    %28 = vector.shape_cast %27 : vector<2xf32> to vector<2x1xf32>
    %29 = tpu.reciprocal %28 {approx = true} : vector<2x1xf32> -> vector<2x1xf32>
    %30 = vector.broadcast %29 : vector<2x1xf32> to vector<2x8xf32>
    %31 = arith.mulf %26, %30 : vector<2x8xf32>
    %32 = vector.shape_cast %31 : vector<2x8xf32> to vector<2x1x8xf32>
    %c0_17 = arith.constant 0 : index
    %c0_18 = arith.constant 0 : index
    %c0_19 = arith.constant 0 : index
    %33 = vector.load %arg3[%c0_17, %c0_18, %c0_19] : memref<2x8x32xf32, #tpu.memory_space<vmem>>, vector<2x8x32xf32>
    "tpu.trace_start"() <{level = 10 : i32, message = "bqk,bkr->bqr"}> : () -> ()
    %cst_20 = arith.constant dense<0.000000e+00> : vector<2x1x32xf32>
    %34 = tpu.matmul %32, %33, %cst_20 {dimension_numbers = #tpu.dot_dimension_numbers<[2], [1], [1], [2], [0, 0, 0, 1, 1, 2], [0], [0]>} : vector<2x1x8xf32>, vector<2x8x32xf32>, vector<2x1x32xf32> -> vector<2x1x32xf32>
    "tpu.trace_stop"() : () -> ()
    %35 = vector.shape_cast %34 : vector<2x1x32xf32> to vector<2x32xf32>
    %c0_21 = arith.constant 0 : index
    %c0_22 = arith.constant 0 : index
    %36 = vector.load %arg9[%c0_21, %c0_22] : memref<2x32xf32, #tpu.memory_space<vmem>>, vector<2x32xf32>
    tpu.vector_store %arg9[%c0_21, %c0_22], %35 {strides = array<i32>} : memref<2x32xf32, #tpu.memory_space<vmem>>, vector<2x32xf32>,
    return
  }
  func.func @transform_0(%arg0: i32) -> (i32, i32) {
    %c0_i32 = arith.constant 0 : i32
    %c0_i32_0 = arith.constant 0 : i32
    return %arg0, %c0_i32 : i32, i32
  }
  func.func @transform_1(%arg0: i32) -> (i32, i32, i32) {
    %c0_i32 = arith.constant 0 : i32
    %c0_i32_0 = arith.constant 0 : i32
    %c0_i32_1 = arith.constant 0 : i32
    return %arg0, %c0_i32, %c0_i32_0 : i32, i32, i32
  }
  func.func @transform_2(%arg0: i32) -> (i32, i32, i32) {
    %c0_i32 = arith.constant 0 : i32
    %c0_i32_0 = arith.constant 0 : i32
    %c0_i32_1 = arith.constant 0 : i32
    return %arg0, %c0_i32, %c0_i32_0 : i32, i32, i32
  }
  func.func @transform_3(%arg0: i32) -> (i32, i32) {
    %c0_i32 = arith.constant 0 : i32
    %c0_i32_0 = arith.constant 0 : i32
    return %arg0, %c0_i32 : i32, i32
  }
  func.func @transform_4(%arg0: i32) -> (i32, i32) {
    %c0_i32 = arith.constant 0 : i32
    %c0_i32_0 = arith.constant 0 : i32
    %c0_i32_1 = arith.constant 0 : i32
    return %c0_i32, %c0_i32_0 : i32, i32
  }
  func.func @transform_5(%arg0: i32) -> (i32, i32) {
    %c0_i32 = arith.constant 0 : i32
    %c0_i32_0 = arith.constant 0 : i32
    %c0_i32_1 = arith.constant 0 : i32
    return %c0_i32, %c0_i32_0 : i32, i32
  }
  func.func @transform_6(%arg0: i32) -> (i32, i32) {
    %c0_i32 = arith.constant 0 : i32
    %c0_i32_0 = arith.constant 0 : i32
    %c0_i32_1 = arith.constant 0 : i32
    return %c0_i32, %c0_i32_0 : i32, i32
  }
  func.func @transform_7(%arg0: i32) -> (i32, i32) {
    %c0_i32 = arith.constant 0 : i32
    %c0_i32_0 = arith.constant 0 : i32
    %c0_i32_1 = arith.constant 0 : i32
    return %c0_i32, %c0_i32_0 : i32, i32
  }
  func.func @transform_8(%arg0: i32) -> (i32, i32) {
    %c0_i32 = arith.constant 0 : i32
    %c0_i32_0 = arith.constant 0 : i32
    return %arg0, %c0_i32 : i32, i32
  }
}

</mosaic_0001>

<llo_original>
// kernel: tpu_custom_call.1
$region0: #{tpu_custom_call.1}
  #allocation0 [shape = 'u32[]', space=smem, size = 0x4, offset = 0x4, fixed_abs, tag = 'smem constant byte address 0x4 - core index']
  #allocation1 [shape = 'u32[144,128]{1,0:T(1,128)}', space=vmem, size = 0x12000, scoped, tag = 'internal scratch']
  #allocation2 [shape = 'f32[1,1]{1,0:T(1,128)S(1)}', space=vmem, size = 0x200, scoped, tag = 'scoped memory for tpu_custom_call.1']
  %s0 = inlined_call_operand.vmem [shape: f32[2,32], index: 0, kind: input, shape index: {}]
  %s1 = inlined_call_operand.hbm [shape: f32[2,8,32], index: 1, kind: input, shape index: {}]
  %s2 = inlined_call_operand.hbm [shape: f32[2,8,32], index: 2, kind: input, shape index: {}]
  %s3 = inlined_call_operand.vmem [shape: f32[2,8], index: 3, kind: input, shape index: {}]
  %s4 = inlined_call_operand.hbm [shape: f32[32,32], index: 4, kind: input, shape index: {}]
  %s5 = inlined_call_operand.vmem [shape: f32[1,32], index: 5, kind: input, shape index: {}]
  %s6 = inlined_call_operand.vmem [shape: f32[1,32], index: 6, kind: input, shape index: {}]
  %s7 = inlined_call_operand.<no memory space> [shape: f32[1,1], index: 7, kind: input, shape index: {}]
  %s8 = inlined_call_operand.hbm [shape: f32[2,32], index: 8, kind: output, shape index: {}]
  %s9 = sld [smem:[#allocation0]]
  $region54: #{tpu_custom_call.1} parent=0
    _
  %s11 = ssub.s32 1, %s9
  %s12 = scalar_select 0, %s11, %s9
  %v13 = vstv %s7
  %14 = vst [vmem:[#allocation2] sm:$0x1] %v13
  $region1: #{tpu_custom_call.1} parent=0
    #allocation3 [shape = 'u8[8192]{0}', space=vmem, size = 0x2000, scoped, tag = 'input window, operand 1, single buffered']
    #allocation4 [shape = 's32[1]{0}', space=sflag, size = 0x4, scoped, tag = 'scoped memory for tpu_custom_call.1']
    #allocation5 [shape = 's32[1]{0}', space=sflag, size = 0x4, scoped, tag = 'scoped memory for tpu_custom_call.1']
    #allocation6 [shape = 'u8[8192]{0}', space=vmem, size = 0x2000, scoped, tag = 'input window, operand 2, single buffered']
    #allocation7 [shape = 's32[1]{0}', space=sflag, size = 0x4, scoped, tag = 'scoped memory for tpu_custom_call.1']
    #allocation8 [shape = 'u8[16384]{0}', space=vmem, size = 0x4000, scoped, tag = 'input window, operand 4, single buffered']
    #allocation9 [shape = 'u8[1024]{0}', space=vmem, size = 0x400, scoped, tag = 'output window, operand 0, single buffered']
    %15 = vsyncpa [#allocation4], 0
    %16 = vsyncpa [#allocation7], 0
    %17 = vsyncpa [#allocation5], 0
    // Predicated region
    $region2: #{tpu_custom_call.1} parent=1 // pred_check
      _
    $region3: #{tpu_custom_call.1} parent=1 // pred_check_branch
      %19 = sbr.rel (0) target = $region5
    $region4: #{tpu_custom_call.1} parent=1 // pred_region
      _
    $region5: #{tpu_custom_call.1} parent=1 // pred_fallthru
      _
    // Predicated region
    $region6: #{tpu_custom_call.1} parent=1 // pred_check
      _
    $region7: #{tpu_custom_call.1} parent=1 // pred_check_branch
      %21 = sbr.rel (0) target = $region9
    $region8: #{tpu_custom_call.1} parent=1 // pred_region
      %s23 = ssub.s32 256, 256
      %24 = vsyncadd [#allocation4], %s23
      %s25 = sshll.u32 [#allocation3], 4
      %s26 = int_to_ptr.vmem [resolvable:$true] %s25
      %31 = dma.hbm_to_vmem [thread:$0]  %s1, 256, %s26, [#allocation4], 128, 128, 8
    $region9: #{tpu_custom_call.1} parent=1 // pred_fallthru
      _
    // Predicated region
    $region10: #{tpu_custom_call.1} parent=1 // pred_check
      _
    $region11: #{tpu_custom_call.1} parent=1 // pred_check_branch
      %33 = sbr.rel (0) target = $region13
    $region12: #{tpu_custom_call.1} parent=1 // pred_region
      %s35 = ssub.s32 256, 256
      %36 = vsyncadd [#allocation7], %s35
      %s37 = sshll.u32 [#allocation6], 4
      %s38 = int_to_ptr.vmem [resolvable:$true] %s37
      %43 = dma.hbm_to_vmem [thread:$0]  %s2, 256, %s38, [#allocation7], 128, 128, 8
    $region13: #{tpu_custom_call.1} parent=1 // pred_fallthru
      _
    // Predicated region
    $region14: #{tpu_custom_call.1} parent=1 // pred_check
      _
    $region15: #{tpu_custom_call.1} parent=1 // pred_check_branch
      %45 = sbr.rel (0) target = $region17
    $region16: #{tpu_custom_call.1} parent=1 // pred_region
      _
    $region17: #{tpu_custom_call.1} parent=1 // pred_fallthru
      _
    // Predicated region
    $region18: #{tpu_custom_call.1} parent=1 // pred_check
      _
    $region19: #{tpu_custom_call.1} parent=1 // pred_check_branch
      %47 = sbr.rel (0) target = $region21
    $region20: #{tpu_custom_call.1} parent=1 // pred_region
      %s49 = ssub.s32 512, 512
      %50 = vsyncadd [#allocation7], %s49
      %s51 = sshll.u32 [#allocation8], 4
      %s52 = int_to_ptr.vmem [resolvable:$true] %s51
      %57 = dma.hbm_to_vmem [thread:$0]  %s4, 512, %s52, [#allocation7], 128, 128, 8
    $region21: #{tpu_custom_call.1} parent=1 // pred_fallthru
      _
    // Predicated region
    $region22: #{tpu_custom_call.1} parent=1 // pred_check
      _
    $region23: #{tpu_custom_call.1} parent=1 // pred_check_branch
      %59 = sbr.rel (0) target = $region25
    $region24: #{tpu_custom_call.1} parent=1 // pred_region
      _
    $region25: #{tpu_custom_call.1} parent=1 // pred_fallthru
      _
    // Predicated region
    $region26: #{tpu_custom_call.1} parent=1 // pred_check
      _
    $region27: #{tpu_custom_call.1} parent=1 // pred_check_branch
      %61 = sbr.rel (0) target = $region29
    $region28: #{tpu_custom_call.1} parent=1 // pred_region
      _
    $region29: #{tpu_custom_call.1} parent=1 // pred_fallthru
      _
    // Predicated region
    $region30: #{tpu_custom_call.1} parent=1 // pred_check
      _
    $region31: #{tpu_custom_call.1} parent=1 // pred_check_branch
      %63 = sbr.rel (0) target = $region33
    $region32: #{tpu_custom_call.1} parent=1 // pred_region
      _
    $region33: #{tpu_custom_call.1} parent=1 // pred_fallthru
      _
    // Predicated region
    $region34: #{tpu_custom_call.1} parent=1 // pred_check
      _
    $region35: #{tpu_custom_call.1} parent=1 // pred_check_branch
      %65 = sbr.rel (0) target = $region37
    $region36: #{tpu_custom_call.1} parent=1 // pred_region
      %66 = dma.done [#allocation4], 256
    $region37: #{tpu_custom_call.1} parent=1 // pred_fallthru
      _
    // Predicated region
    $region38: #{tpu_custom_call.1} parent=1 // pred_check
      _
    $region39: #{tpu_custom_call.1} parent=1 // pred_check_branch
      %68 = sbr.rel (0) target = $region41
    $region40: #{tpu_custom_call.1} parent=1 // pred_region
      %69 = dma.done [#allocation7], 256
    $region41: #{tpu_custom_call.1} parent=1 // pred_fallthru
      _
    // Predicated region
    $region42: #{tpu_custom_call.1} parent=1 // pred_check
      _
    $region43: #{tpu_custom_call.1} parent=1 // pred_check_branch
      %71 = sbr.rel (0) target = $region45
    $region44: #{tpu_custom_call.1} parent=1 // pred_region
      %72 = dma.done [#allocation7], 512
    $region45: #{tpu_custom_call.1} parent=1 // pred_fallthru
      _
    %v73 = vld [vmem:[%s0] sm:$0x3]
    %v74 = vld [vmem:[#allocation8] sm:$0xff]
    %v75 = vld [vmem:[#allocation8 + $0x8] sm:$0xff]
    %v76 = vld [vmem:[#allocation8 + $0x10] sm:$0xff]
    %v77 = vld [vmem:[#allocation8 + $0x18] sm:$0xff]
    %v78 = vld [vmem:[%s5] sm:$0x1]
    %v80 = vlaneseq
    %v81 = vshrl.u32 %v80, 7
    %v82 = vsub.s32 0, %v81
    %v83 = vrot.slane %v78, %v82
    %vm85 = vcmask 261120
    %v87 = vsel %vm85, %v73, 0
    %89 = vmatprep.subr.mxu0 0.0
    %90 = vmatpush1.msra.mxu0 %v74
    %91 = vmatprep.subr.mxu0 0.0
    %92 = vmatpush1.msra.mxu0 %v75
    %93 = vmatprep.subr.mxu0 0.0
    %94 = vmatpush1.msra.mxu0 %v76
    %95 = vmatprep.subr.mxu0 0.0
    %96 = vmatpush1.msra.mxu0 %v77
    %97 = vmatprep.subr.mxu0 0.0
    %98 = vmatpush1.msra.mxu0 0.0
    %99 = vmatprep.subr.mxu0 0.0
    %100 = vmatpush1.msra.mxu0 0.0
    %101 = vmatprep.subr.mxu0 0.0
    %102 = vmatpush1.msra.mxu0 0.0
    %103 = vmatprep.subr.mxu0 0.0
    %104 = vmatpush1.msra.mxu0 0.0
    %105 = vmatprep.subr.mxu0 0.0
    %106 = vmatpush1.msra.mxu0 0.0
    %107 = vmatprep.subr.mxu0 0.0
    %108 = vmatpush1.msra.mxu0 0.0
    %109 = vmatprep.subr.mxu0 0.0
    %110 = vmatpush1.msra.mxu0 0.0
    %111 = vmatprep.subr.mxu0 0.0
    %112 = vmatpush1.msra.mxu0 0.0
    %113 = vmatprep.subr.mxu0 0.0
    %114 = vmatpush1.msra.mxu0 0.0
    %115 = vmatprep.subr.mxu0 0.0
    %116 = vmatpush1.msra.mxu0 0.0
    %117 = vmatprep.subr.mxu0 0.0
    %118 = vmatpush1.msra.mxu0 0.0
    %119 = vmatprep.subr.mxu0 0.0
    %120 = vmatpush1.msra.mxu0 0.0
    %121 = vmatprep.subr.mxu0 0.0
    %122 = vmatpush1.msra.mxu0 0.0
    %123 = vmatprep.subr.mxu0 0.0
    %124 = vmatpush1.msra.mxu0 0.0
    %125 = vmatprep.subr.mxu0 0.0
    %126 = vmatpush1.msra.mxu0 0.0
    %127 = vmatprep.subr.mxu0 0.0
    %128 = vmatpush1.msra.mxu0 0.0
    %129 = vmatprep.subr.mxu0 0.0
    %130 = vmatpush1.msra.mxu0 0.0
    %131 = vmatprep.subr.mxu0 0.0
    %132 = vmatpush1.msra.mxu0 0.0
    %133 = vmatprep.subr.mxu0 0.0
    %134 = vmatpush1.msra.mxu0 0.0
    %135 = vmatprep.subr.mxu0 0.0
    %136 = vmatpush1.msra.mxu0 0.0
    %137 = vmatprep.subr.mxu0 0.0
    %138 = vmatpush1.msra.mxu0 0.0
    %139 = vmatprep.subr.mxu0 0.0
    %140 = vmatpush1.msra.mxu0 0.0
    %141 = vmatprep.subr.mxu0 0.0
    %142 = vmatpush1.msra.mxu0 0.0
    %143 = vmatprep.subr.mxu0 0.0
    %144 = vmatpush1.msra.mxu0 0.0
    %145 = vmatprep.subr.mxu0 0.0
    %146 = vmatpush1.msra.mxu0 0.0
    %147 = vmatprep.subr.mxu0 0.0
    %148 = vmatpush1.msra.mxu0 0.0
    %149 = vmatprep.subr.mxu0 0.0
    %150 = vmatpush1.msra.mxu0 0.0
    %151 = vmatprep.subr.mxu0 0.0
    %152 = vmatpush1.msra.mxu0 0.0
    %153 = vmatprep.mubr.f32.mxu0 0.0
    %154 = vmatmul.mubr.f32.gmra.mrb[0].mxu0 %v87
    %v155 = vpop.f32.mrb[0].mxu0
    %v156 = vadd.f32 %v83, %v155
    %v157 = vpop.f32.mrb[0].mxu0
    %158 = vdwg.mxu0
    %v159 = vld [vmem:[#allocation3] sm:$0xff]
    %v160 = vld [vmem:[#allocation3 + $0x8] sm:$0xff]
    %v163 = vunpack.c.l.s4 1966171168
    %v164 = vunpack.c.0.s8 %v163
    %v165 = vlaneseq
    %v166 = vshrl.u32 %v165, 7
    %v167 = vsub.s32 %v164, %v166
    %v168 = vrot.slane %v156, %v167
    %v169 = vcombine.high %v168, %v168
    %v171 = vunpack.c.l.s4 1966171168
    %v172 = vunpack.c.0.s8 %v171
    %v173 = vlaneseq
    %v174 = vshrl.u32 %v173, 7
    %v175 = vsub.s32 %v172, %v174
    %v176 = vrot.slane %v168, %v175
    %v178 = vunpack.c.l.s4 1966171168
    %v179 = vunpack.c.0.s8 %v178
    %v180 = vlaneseq
    %v181 = vshrl.u32 %v180, 7
    %v182 = vsub.s32 %v179, %v181
    %v183 = vrot.slane %v169, %v182
    %v184 = vlaneseq
    %v185 = vshrl.u32 %v184, 7
    %v186 = vsub.s32 0, %v185
    %v187 = vrot.slane %v176, %v186
    %v188 = vlaneseq
    %v189 = vshrl.u32 %v188, 7
    %v190 = vsub.s32 0, %v189
    %v191 = vrot.slane %v183, %v190
    %v194 = vadd.f32 %v159, %v187
    %v195 = vadd.f32 %v160, %v191
    %v196 = vtanh.pop %v194
    %v197 = vtanh.pop %v195
    %v198 = vld [vmem:[%s6] sm:$0x1]
    %v200 = vlaneseq
    %v201 = vshrl.u32 %v200, 7
    %v202 = vsub.s32 0, %v201
    %v203 = vrot.slane %v198, %v202
    %v205 = vmul.f32 %v196, %v203
    %v206 = vmul.f32 %v197, %v203
    %v207 = vsel %vm85, %v205, 0.0
    %208 = vadd.xlane.f32.xlu0 %v207
    %v209 = vpop.xlane.xlu0 %208
    %v210 = vsel %vm85, %v206, 0.0
    %211 = vadd.xlane.f32.xlu0 %v210
    %v212 = vpop.xlane.xlu0 %211
    %v213 = vld [vmem:[#allocation2] sm:$0x1]
    %s214 = vtos %v213
    %v215 = vstv %s214
    %v216 = vadd.f32 %v209, %v215
    %v217 = vadd.f32 %v212, %v215
    %v220 = vlaneseq
    %v221 = vand.u32 %v220, 127
    %v222 = vlaneseq
    %v223 = vshrl.u32 %v222, 7
    %v224 = vsub.s32 %v221, %v223
    %v225 = vrot.slane %v216, %v224
    %v226 = vlaneseq
    %v227 = vshrl.u32 %v226, 7
    %v228 = vsub.s32 %v221, %v227
    %v229 = vrot.slane %v217, %v228
    %vm230 = vcmask 1041409
    %v231 = vsel %vm230, %v229, %v225
    %vm233 = vcmask 58368
    %v234 = vsel %vm233, %v231, -inf
    %235 = vmax.xlane.f32.xlu0 %v234
    %v236 = vpop.xlane.xlu0 %235
    %v238 = vlaneseq
    %v239 = vshrl.u32 %v238, 7
    %v240 = vsub.s32 0, %v239
    %v241 = vrot.slane %v236, %v240
    %v242 = vlaneseq
    %v243 = vshrl.u32 %v242, 7
    %v244 = vsub.s32 1, %v243
    %v245 = vrot.slane %v236, %v244
    %v248 = vsub.f32 %v216, %v241
    %v249 = vsub.f32 %v217, %v245
    %v250 = vmul.f32 %v248, 1.442695
    %v251 = vpow.pop %v250
    %v252 = vmul.f32 %v249, 1.442695
    %v253 = vpow.pop %v252
    %v254 = vld [vmem:[%s3] sm:$0x3]
    %v256 = vlaneseq
    %v257 = vshrl.u32 %v256, 7
    %v258 = vsub.s32 0, %v257
    %v259 = vrot.slane %v254, %v258
    %261 = vbcast.lane.b32.xlu0 %v259, 256
    %v262 = vpop.permute.xlu0 %261
    %v263 = vlaneseq
    %v264 = vshrl.u32 %v263, 7
    %v265 = vsub.s32 1, %v264
    %v266 = vrot.slane %v254, %v265
    %268 = vbcast.lane.b32.xlu0 %v266, 256
    %v269 = vpop.permute.xlu0 %268
    %v272 = vmul.f32 %v251, %v262
    %v273 = vmul.f32 %v253, %v269
    %276 = vset.pattern.permute.xlu0 0
    %277 = vperm.xlu0 %276, %v272
    %v278 = vpop.permute.xlu0 %277
    %279 = vset.pattern.permute.xlu0 0
    %280 = vperm.xlu0 %279, %v273
    %v281 = vpop.permute.xlu0 %280
    %v282 = vlaneseq
    %v283 = vshrl.u32 %v282, 7
    %v284 = vsub.s32 %v221, %v283
    %v285 = vrot.slane %v278, %v284
    %v286 = vlaneseq
    %v287 = vshrl.u32 %v286, 7
    %v288 = vsub.s32 %v221, %v287
    %v289 = vrot.slane %v281, %v288
    %v290 = vsel %vm230, %v289, %v285
    %v292 = vsel %vm233, %v290, 0.0
    %293 = vadd.xlane.f32.xlu0 %v292
    %v294 = vpop.xlane.xlu0 %293
    %v295 = vrcp.pop %v294
    %v297 = vlaneseq
    %v298 = vshrl.u32 %v297, 7
    %v299 = vsub.s32 0, %v298
    %v300 = vrot.slane %v295, %v299
    %v301 = vlaneseq
    %v302 = vshrl.u32 %v301, 7
    %v303 = vsub.s32 1, %v302
    %v304 = vrot.slane %v295, %v303
    %v307 = vmul.f32 %v272, %v300
    %v308 = vmul.f32 %v273, %v304
    %v309 = vld [vmem:[#allocation6] sm:$0xff]
    %v310 = vld [vmem:[#allocation6 + $0x8] sm:$0xff]
    %312 = vset.pattern.permute.xlu0 0
    %313 = vperm.xlu0 %312, %v307
    %v314 = vpop.permute.xlu0 %313
    %v315 = vlaneseq
    %v316 = vshrl.u32 %v315, 7
    %v317 = vsub.s32 %v221, %v316
    %v318 = vrot.slane %v314, %v317
    %vm319 = vcmask 64512
    %v320 = vsel %vm319, %v318, 0
    %322 = vmatprep.subr.mxu0 0.0
    %323 = vmatpush1.msra.mxu0 %v309
    %324 = vmatprep.subr.mxu0 0.0
    %325 = vmatpush1.msra.mxu0 0.0
    %326 = vmatprep.subr.mxu0 0.0
    %327 = vmatpush1.msra.mxu0 0.0
    %328 = vmatprep.subr.mxu0 0.0
    %329 = vmatpush1.msra.mxu0 0.0
    %330 = vmatprep.subr.mxu0 0.0
    %331 = vmatpush1.msra.mxu0 0.0
    %332 = vmatprep.subr.mxu0 0.0
    %333 = vmatpush1.msra.mxu0 0.0
    %334 = vmatprep.subr.mxu0 0.0
    %335 = vmatpush1.msra.mxu0 0.0
    %336 = vmatprep.subr.mxu0 0.0
    %337 = vmatpush1.msra.mxu0 0.0
    %338 = vmatprep.subr.mxu0 0.0
    %339 = vmatpush1.msra.mxu0 0.0
    %340 = vmatprep.subr.mxu0 0.0
    %341 = vmatpush1.msra.mxu0 0.0
    %342 = vmatprep.subr.mxu0 0.0
    %343 = vmatpush1.msra.mxu0 0.0
    %344 = vmatprep.subr.mxu0 0.0
    %345 = vmatpush1.msra.mxu0 0.0
    %346 = vmatprep.subr.mxu0 0.0
    %347 = vmatpush1.msra.mxu0 0.0
    %348 = vmatprep.subr.mxu0 0.0
    %349 = vmatpush1.msra.mxu0 0.0
    %350 = vmatprep.subr.mxu0 0.0
    %351 = vmatpush1.msra.mxu0 0.0
    %352 = vmatprep.subr.mxu0 0.0
    %353 = vmatpush1.msra.mxu0 0.0
    %354 = vmatprep.subr.mxu0 0.0
    %355 = vmatpush1.msra.mxu0 0.0
    %356 = vmatprep.subr.mxu0 0.0
    %357 = vmatpush1.msra.mxu0 0.0
    %358 = vmatprep.subr.mxu0 0.0
    %359 = vmatpush1.msra.mxu0 0.0
    %360 = vmatprep.subr.mxu0 0.0
    %361 = vmatpush1.msra.mxu0 0.0
    %362 = vmatprep.subr.mxu0 0.0
    %363 = vmatpush1.msra.mxu0 0.0
    %364 = vmatprep.subr.mxu0 0.0
    %365 = vmatpush1.msra.mxu0 0.0
    %366 = vmatprep.subr.mxu0 0.0
    %367 = vmatpush1.msra.mxu0 0.0
    %368 = vmatprep.subr.mxu0 0.0
    %369 = vmatpush1.msra.mxu0 0.0
    %370 = vmatprep.subr.mxu0 0.0
    %371 = vmatpush1.msra.mxu0 0.0
    %372 = vmatprep.subr.mxu0 0.0
    %373 = vmatpush1.msra.mxu0 0.0
    %374 = vmatprep.subr.mxu0 0.0
    %375 = vmatpush1.msra.mxu0 0.0
    %376 = vmatprep.subr.mxu0 0.0
    %377 = vmatpush1.msra.mxu0 0.0
    %378 = vmatprep.subr.mxu0 0.0
    %379 = vmatpush1.msra.mxu0 0.0
    %380 = vmatprep.subr.mxu0 0.0
    %381 = vmatpush1.msra.mxu0 0.0
    %382 = vmatprep.subr.mxu0 0.0
    %383 = vmatpush1.msra.mxu0 0.0
    %384 = vmatprep.subr.mxu0 0.0
    %385 = vmatpush1.msra.mxu0 0.0
    %386 = vmatprep.mubr.f32.mxu0 0.0
    %387 = vmatmul.mubr.f32.gmra.mrb[0].mxu0 %v320
    %v388 = vpop.f32.mrb[0].mxu0
    %v389 = vadd.f32 0.0, %v388
    %v390 = vpop.f32.mrb[0].mxu0
    %391 = vdwg.mxu0
    %393 = vset.pattern.permute.xlu0 0
    %394 = vperm.xlu0 %393, %v308
    %v395 = vpop.permute.xlu0 %394
    %v396 = vlaneseq
    %v397 = vshrl.u32 %v396, 7
    %v398 = vsub.s32 %v221, %v397
    %v399 = vrot.slane %v395, %v398
    %v400 = vsel %vm319, %v399, 0
    %402 = vmatprep.subr.mxu0 0.0
    %403 = vmatpush1.msra.mxu0 %v310
    %404 = vmatprep.subr.mxu0 0.0
    %405 = vmatpush1.msra.mxu0 0.0
    %406 = vmatprep.subr.mxu0 0.0
    %407 = vmatpush1.msra.mxu0 0.0
    %408 = vmatprep.subr.mxu0 0.0
    %409 = vmatpush1.msra.mxu0 0.0
    %410 = vmatprep.subr.mxu0 0.0
    %411 = vmatpush1.msra.mxu0 0.0
    %412 = vmatprep.subr.mxu0 0.0
    %413 = vmatpush1.msra.mxu0 0.0
    %414 = vmatprep.subr.mxu0 0.0
    %415 = vmatpush1.msra.mxu0 0.0
    %416 = vmatprep.subr.mxu0 0.0
    %417 = vmatpush1.msra.mxu0 0.0
    %418 = vmatprep.subr.mxu0 0.0
    %419 = vmatpush1.msra.mxu0 0.0
    %420 = vmatprep.subr.mxu0 0.0
    %421 = vmatpush1.msra.mxu0 0.0
    %422 = vmatprep.subr.mxu0 0.0
    %423 = vmatpush1.msra.mxu0 0.0
    %424 = vmatprep.subr.mxu0 0.0
    %425 = vmatpush1.msra.mxu0 0.0
    %426 = vmatprep.subr.mxu0 0.0
    %427 = vmatpush1.msra.mxu0 0.0
    %428 = vmatprep.subr.mxu0 0.0
    %429 = vmatpush1.msra.mxu0 0.0
    %430 = vmatprep.subr.mxu0 0.0
    %431 = vmatpush1.msra.mxu0 0.0
    %432 = vmatprep.subr.mxu0 0.0
    %433 = vmatpush1.msra.mxu0 0.0
    %434 = vmatprep.subr.mxu0 0.0
    %435 = vmatpush1.msra.mxu0 0.0
    %436 = vmatprep.subr.mxu0 0.0
    %437 = vmatpush1.msra.mxu0 0.0
    %438 = vmatprep.subr.mxu0 0.0
    %439 = vmatpush1.msra.mxu0 0.0
    %440 = vmatprep.subr.mxu0 0.0
    %441 = vmatpush1.msra.mxu0 0.0
    %442 = vmatprep.subr.mxu0 0.0
    %443 = vmatpush1.msra.mxu0 0.0
    %444 = vmatprep.subr.mxu0 0.0
    %445 = vmatpush1.msra.mxu0 0.0
    %446 = vmatprep.subr.mxu0 0.0
    %447 = vmatpush1.msra.mxu0 0.0
    %448 = vmatprep.subr.mxu0 0.0
    %449 = vmatpush1.msra.mxu0 0.0
    %450 = vmatprep.subr.mxu0 0.0
    %451 = vmatpush1.msra.mxu0 0.0
    %452 = vmatprep.subr.mxu0 0.0
    %453 = vmatpush1.msra.mxu0 0.0
    %454 = vmatprep.subr.mxu0 0.0
    %455 = vmatpush1.msra.mxu0 0.0
    %456 = vmatprep.subr.mxu0 0.0
    %457 = vmatpush1.msra.mxu0 0.0
    %458 = vmatprep.subr.mxu0 0.0
    %459 = vmatpush1.msra.mxu0 0.0
    %460 = vmatprep.subr.mxu0 0.0
    %461 = vmatpush1.msra.mxu0 0.0
    %462 = vmatprep.subr.mxu0 0.0
    %463 = vmatpush1.msra.mxu0 0.0
    %464 = vmatprep.subr.mxu0 0.0
    %465 = vmatpush1.msra.mxu0 0.0
    %466 = vmatprep.mubr.f32.mxu0 0.0
    %467 = vmatmul.mubr.f32.gmra.mrb[0].mxu0 %v400
    %v468 = vpop.f32.mrb[0].mxu0
    %v469 = vadd.f32 0.0, %v468
    %v470 = vpop.f32.mrb[0].mxu0
    %471 = vdwg.mxu0
    %v474 = vrot.slane %v469, 7
    %v475 = vsel %vm230, %v474, %v389
    %vm477 = vcmask 254976
    %478 = vst.msk [vmem:[#allocation9] sm:$0x3] %vm477, %v475
    // Predicated region
    $region46: #{tpu_custom_call.1} parent=1 // pred_check
      _
    $region47: #{tpu_custom_call.1} parent=1 // pred_check_branch
      %480 = sbr.rel (0) target = $region49
    $region48: #{tpu_custom_call.1} parent=1 // pred_region
      %s482 = ssub.s32 32, 32
      %483 = vsyncadd [#allocation5], %s482
      %s485 = sshll.u32 [#allocation9], 4
      %s486 = int_to_ptr.vmem [resolvable:$true] %s485
      %488 = dma.vmem_to_hbm [thread:$0]  %s486, 32, %s8, [#allocation5]
    $region49: #{tpu_custom_call.1} parent=1 // pred_fallthru
      _
    // Predicated region
    $region50: #{tpu_custom_call.1} parent=1 // pred_check
      _
    $region51: #{tpu_custom_call.1} parent=1 // pred_check_branch
      %490 = sbr.rel (0) target = $region53
    $region52: #{tpu_custom_call.1} parent=1 // pred_region
      %491 = dma.done [#allocation5], 32
    $region53: #{tpu_custom_call.1} parent=1 // pred_fallthru
      _
    %492 = vsyncpa [#allocation4], 1
    %493 = vsyncpa [#allocation7], 1
    %494 = vsyncpa [#allocation5], 1

</llo_original>
